<compile_context>
chip_gen: v5e
topology: v5e:2x2
jax: 0.10.0
libtpu: 0.0.40
codegen_flags: <defaults>
</compile_context>

<pallas_src>
import jax
import jax.numpy as jnp
from jax.experimental import pallas as pl
from jax.experimental.pallas import tpu as pltpu

# ---------------- config (small test shapes, consistent with the module) -----
IMG_SIZE = 16          # module default is 512; small for the test
CHANNELS = 3           # context=True implies a 3-channel input
TIMESTEPS = 10
BATCH = 2
LANE = 128
MAX_TILE_R = 512       # sublane-row tile cap for production-size inputs


def _pick_tile_r(r_total, max_tile=MAX_TILE_R):
    """Largest row tile that is either the full extent or a multiple of 8."""
    if r_total <= max_tile:
        return r_total
    for cand in range(max_tile - (max_tile % 8), 7, -8):
        if r_total % cand == 0:
            return cand
    return r_total


# ------------------------- fused q_sample + denoise kernel -------------------
def diffusion_fused_kernel(y_ref, z_ref, lam_ref, inv_lam_ref, msk_ref,
                           w_ref, bias_ref, temb_ref, xmix_ref, xrec_ref):
    """One (1, C, TILE_R, 128) tile: Poisson-mix then 1x1 channel-mix denoise.

    y_ref/z_ref:   (1, C, TILE_R, 128) VMEM  (input image / Gaussian noise)
    lam/inv_lam/msk: (B,) SMEM scalars (per-batch lambda_t, 1/lambda_t, t!=0)
    w_ref: (C, C) SMEM, bias_ref: (C,) SMEM, temb_ref: (B, C) SMEM
    xmix_ref/xrec_ref: (1, C, TILE_R, 128) VMEM outputs
    """
    b = pl.program_id(0)
    lam = lam_ref[b]
    inv_lam = inv_lam_ref[b]
    msk = msk_ref[b]

    x = y_ref[...]                      # (1, C, TILE_R, 128) f32
    z = z_ref[...]

    # torch.poisson(lambda*x + 10): rate >= 10 always, so use the normal
    # approximation round(rate + sqrt(rate)*z) clamped at 0.
    # TODO(synk): exact Poisson (Knuth product-of-uniforms + pltpu.prng_*)
    #             dropped — the hardware PRNG primitives have no CPU-interpret
    #             lowering and the normal approximation is adequate for
    #             rate >= 10 (the +10 offset guarantees this).
    rate = lam * x + 10.0
    pois = jnp.maximum(jnp.floor(rate + jnp.sqrt(rate) * z + 0.5), 0.0)
    x_mix = msk * (pois * inv_lam) + (1.0 - msk) * x
    xmix_ref[...] = x_mix

    # Synthetic denoise_fn: 1x1 channel mix + bias + sinusoidal time embedding,
    # computed on the just-produced x_mix tile (no HBM round trip).
    # TODO(synk): denoise_fn is an externally injected nn.Module in SPDiff;
    #             this deterministic stand-in keeps the (x, t) -> x_recon shape.
    c = w_ref.shape[0]
    for o in range(c):                              # static tiny channel loop
        acc = w_ref[o, 0] * x_mix[0, 0]
        for k in range(1, c):
            acc = acc + w_ref[o, k] * x_mix[0, k]
        xrec_ref[0, o, :, :] = acc + bias_ref[o] + temb_ref[b, o]


# ------------------------------- forward glue --------------------------------
def diffusion_forward(y, key, lambda_buf, num_timesteps, denoise_w, denoise_b):
    """Pallas equivalent of Diffusion.forward(y) -> (x_recon, x_mix)."""
    b, c, h, w = y.shape
    assert h == IMG_SIZE and w == IMG_SIZE
    hw = h * w
    assert hw % LANE == 0, "H*W must be a multiple of 128 for this layout"
    r_total = hw // LANE
    tile_r = _pick_tile_r(r_total)
    n_row_tiles = r_total // tile_r

    k_t, k_noise = jax.random.split(key)
    # t = torch.randint(0, num_timesteps, (b,))
    t = jax.random.randint(k_t, (b,), 0, num_timesteps, dtype=jnp.int32)

    # extract(lambda_, t, x.shape) -> per-batch scalar; mask = (t != 0)
    lambda_t = lambda_buf[t].astype(jnp.float32)                 # (b,)
    inv_lambda_t = (1.0 / lambda_t).astype(jnp.float32)          # (b,)
    nonzero_mask = (t != 0).astype(jnp.float32)                  # (b,)

    # host-generated Gaussian noise driving the Poisson normal approximation
    z = jax.random.normal(k_noise, (b, c, r_total, LANE), dtype=jnp.float32)

    # deterministic time embedding for the synthetic denoise_fn
    freqs = jnp.arange(1, c + 1, dtype=jnp.float32)
    temb = jnp.sin(t.astype(jnp.float32)[:, None] * freqs[None, :] * 0.1)  # (b,c)

    y4 = y.reshape(b, c, r_total, LANE).astype(jnp.float32)

    blk = pl.BlockSpec((1, c, tile_r, LANE), lambda i, j: (i, 0, j, 0))
    smem = pl.BlockSpec(memory_space=pltpu.MemorySpace.SMEM)

    x_mix4, x_recon4 = pl.pallas_call(
        diffusion_fused_kernel,
        grid=(b, n_row_tiles),
        in_specs=[blk, blk, smem, smem, smem, smem, smem, smem],
        out_specs=(blk, blk),
        out_shape=(jax.ShapeDtypeStruct((b, c, r_total, LANE), jnp.float32),
                   jax.ShapeDtypeStruct((b, c, r_total, LANE), jnp.float32)),
        compiler_params=pltpu.CompilerParams(
            dimension_semantics=("parallel", "parallel")),
    )(y4, z, lambda_t, inv_lambda_t, nonzero_mask,
      denoise_w.astype(jnp.float32), denoise_b.astype(jnp.float32), temb)

    x_mix = x_mix4.reshape(b, c, h, w)
    x_recon = x_recon4.reshape(b, c, h, w)
    return x_recon, x_mix


if __name__ == "__main__":
    key = jax.random.PRNGKey(0)
    k_y, k_fwd = jax.random.split(key)
    y = jax.random.uniform(k_y, (BATCH, CHANNELS, IMG_SIZE, IMG_SIZE),
                           dtype=jnp.float32)
    # lambda_ registered buffer: deterministic, decreasing in t
    lambda_buf = jnp.linspace(10.0, 1.0, TIMESTEPS).astype(jnp.float32)
    # deterministic synthetic denoise_fn parameters
    denoise_w = (jnp.eye(CHANNELS, dtype=jnp.float32)
                 + 0.01 * jnp.arange(CHANNELS * CHANNELS,
                                     dtype=jnp.float32).reshape(CHANNELS,
                                                                CHANNELS))
    denoise_b = 0.1 * jnp.arange(CHANNELS, dtype=jnp.float32)

    x_recon, x_mix = diffusion_forward(y, k_fwd, lambda_buf, TIMESTEPS,
                                       denoise_w, denoise_b)
    jax.block_until_ready((x_recon, x_mix))

    assert x_recon.shape == y.shape and x_mix.shape == y.shape
    assert bool(jnp.all(jnp.isfinite(x_mix))) and bool(jnp.all(jnp.isfinite(x_recon)))
    assert bool(jnp.all(x_mix >= 0.0))   # Poisson mix of non-negative inputs
    print("KERNEL_OK")
</pallas_src>

<mosaic_0001>
module attributes {stable_mosaic.version = 11 : i64} {
  func.func @diffusion_fused_kernel(%arg0: i32, %arg1: i32, %arg2: memref<1x3x2x128xf32, #tpu.memory_space<vmem>>, %arg3: memref<1x3x2x128xf32, #tpu.memory_space<vmem>>, %arg4: memref<2xf32, #tpu.memory_space<smem>>, %arg5: memref<2xf32, #tpu.memory_space<smem>>, %arg6: memref<2xf32, #tpu.memory_space<smem>>, %arg7: memref<3x3xf32, #tpu.memory_space<smem>>, %arg8: memref<3xf32, #tpu.memory_space<smem>>, %arg9: memref<2x3xf32, #tpu.memory_space<smem>>, %arg10: memref<1x3x2x128xf32, #tpu.memory_space<vmem>>, %arg11: memref<1x3x2x128xf32, #tpu.memory_space<vmem>>) attributes {dimension_semantics = [#tpu.dimension_semantics<parallel>, #tpu.dimension_semantics<parallel>], iteration_bounds = array<i64: 2, 1>, scalar_prefetch = 0 : i64, scratch_operands = 0 : i64, tpu.core_type = #tpu.core_type<tc>, window_params = [{transform_indices = @transform_0, window_bounds = array<i64: 1, 3, 2, 128>}, {transform_indices = @transform_1, window_bounds = array<i64: 1, 3, 2, 128>}, {transform_indices = @transform_2, window_bounds = array<i64: 2>}, {transform_indices = @transform_3, window_bounds = array<i64: 2>}, {transform_indices = @transform_4, window_bounds = array<i64: 2>}, {transform_indices = @transform_5, window_bounds = array<i64: 3, 3>}, {transform_indices = @transform_6, window_bounds = array<i64: 3>}, {transform_indices = @transform_7, window_bounds = array<i64: 2, 3>}, {transform_indices = @transform_8, window_bounds = array<i64: 1, 3, 2, 128>}, {transform_indices = @transform_9, window_bounds = array<i64: 1, 3, 2, 128>}]} {
    %0 = arith.index_cast %arg0 : i32 to index
    %1 = memref.load %arg4[%0] : memref<2xf32, #tpu.memory_space<smem>>
    %2 = arith.index_cast %arg0 : i32 to index
    %3 = memref.load %arg5[%2] : memref<2xf32, #tpu.memory_space<smem>>
    %4 = arith.index_cast %arg0 : i32 to index
    %5 = memref.load %arg6[%4] : memref<2xf32, #tpu.memory_space<smem>>
    %c0 = arith.constant 0 : index
    %c0_0 = arith.constant 0 : index
    %c0_1 = arith.constant 0 : index
    %c0_2 = arith.constant 0 : index
    %6 = vector.load %arg2[%c0, %c0_0, %c0_1, %c0_2] : memref<1x3x2x128xf32, #tpu.memory_space<vmem>>, vector<1x3x2x128xf32>
    %c0_3 = arith.constant 0 : index
    %c0_4 = arith.constant 0 : index
    %c0_5 = arith.constant 0 : index
    %c0_6 = arith.constant 0 : index
    %7 = vector.load %arg3[%c0_3, %c0_4, %c0_5, %c0_6] : memref<1x3x2x128xf32, #tpu.memory_space<vmem>>, vector<1x3x2x128xf32>
    %8 = vector.broadcast %1 : f32 to vector<1x3x2x128xf32>
    %9 = arith.mulf %8, %6 : vector<1x3x2x128xf32>
    %cst = arith.constant 1.000000e+01 : f32
    %10 = vector.broadcast %cst : f32 to vector<1x3x2x128xf32>
    %11 = arith.addf %9, %10 : vector<1x3x2x128xf32>
    %12 = math.sqrt %11 : vector<1x3x2x128xf32>
    %13 = arith.mulf %12, %7 : vector<1x3x2x128xf32>
    %14 = arith.addf %11, %13 : vector<1x3x2x128xf32>
    %cst_7 = arith.constant 5.000000e-01 : f32
    %15 = vector.broadcast %cst_7 : f32 to vector<1x3x2x128xf32>
    %16 = arith.addf %14, %15 : vector<1x3x2x128xf32>
    %17 = math.floor %16 : vector<1x3x2x128xf32>
    %cst_8 = arith.constant 0.000000e+00 : f32
    %18 = vector.broadcast %cst_8 : f32 to vector<1x3x2x128xf32>
    %19 = arith.maximumf %17, %18 : vector<1x3x2x128xf32>
    %20 = vector.broadcast %3 : f32 to vector<1x3x2x128xf32>
    %21 = arith.mulf %19, %20 : vector<1x3x2x128xf32>
    %22 = vector.broadcast %5 : f32 to vector<1x3x2x128xf32>
    %23 = arith.mulf %22, %21 : vector<1x3x2x128xf32>
    %cst_9 = arith.constant 1.000000e+00 : f32
    %24 = arith.subf %cst_9, %5 : f32
    %25 = vector.broadcast %24 : f32 to vector<1x3x2x128xf32>
    %26 = arith.mulf %25, %6 : vector<1x3x2x128xf32>
    %27 = arith.addf %23, %26 : vector<1x3x2x128xf32>
    %c0_10 = arith.constant 0 : index
    %c0_11 = arith.constant 0 : index
    %c0_12 = arith.constant 0 : index
    %c0_13 = arith.constant 0 : index
    %28 = vector.load %arg10[%c0_10, %c0_11, %c0_12, %c0_13] : memref<1x3x2x128xf32, #tpu.memory_space<vmem>>, vector<1x3x2x128xf32>
    tpu.vector_store %arg10[%c0_10, %c0_11, %c0_12, %c0_13], %27 {strides = array<i32>} : memref<1x3x2x128xf32, #tpu.memory_space<vmem>>, vector<1x3x2x128xf32>,
    %c0_14 = arith.constant 0 : index
    %c0_15 = arith.constant 0 : index
    %29 = memref.load %arg7[%c0_14, %c0_15] : memref<3x3xf32, #tpu.memory_space<smem>>
    %30 = vector.extract_strided_slice %27 {offsets = [0, 0, 0, 0], sizes = [1, 1, 2, 128], strides = [1, 1, 1, 1]} : vector<1x3x2x128xf32> to vector<1x1x2x128xf32>
    %31 = vector.shape_cast %30 : vector<1x1x2x128xf32> to vector<2x128xf32>
    %32 = vector.broadcast %29 : f32 to vector<2x128xf32>
    %33 = arith.mulf %32, %31 : vector<2x128xf32>
    %c0_16 = arith.constant 0 : index
    %c1 = arith.constant 1 : index
    %34 = memref.load %arg7[%c0_16, %c1] : memref<3x3xf32, #tpu.memory_space<smem>>
    %35 = vector.extract_strided_slice %27 {offsets = [0, 1, 0, 0], sizes = [1, 1, 2, 128], strides = [1, 1, 1, 1]} : vector<1x3x2x128xf32> to vector<1x1x2x128xf32>
    %36 = vector.shape_cast %35 : vector<1x1x2x128xf32> to vector<2x128xf32>
    %37 = vector.broadcast %34 : f32 to vector<2x128xf32>
    %38 = arith.mulf %37, %36 : vector<2x128xf32>
    %39 = arith.addf %33, %38 : vector<2x128xf32>
    %c0_17 = arith.constant 0 : index
    %c2 = arith.constant 2 : index
    %40 = memref.load %arg7[%c0_17, %c2] : memref<3x3xf32, #tpu.memory_space<smem>>
    %41 = vector.extract_strided_slice %27 {offsets = [0, 2, 0, 0], sizes = [1, 1, 2, 128], strides = [1, 1, 1, 1]} : vector<1x3x2x128xf32> to vector<1x1x2x128xf32>
    %42 = vector.shape_cast %41 : vector<1x1x2x128xf32> to vector<2x128xf32>
    %43 = vector.broadcast %40 : f32 to vector<2x128xf32>
    %44 = arith.mulf %43, %42 : vector<2x128xf32>
    %45 = arith.addf %39, %44 : vector<2x128xf32>
    %c0_18 = arith.constant 0 : index
    %46 = memref.load %arg8[%c0_18] : memref<3xf32, #tpu.memory_space<smem>>
    %47 = vector.broadcast %46 : f32 to vector<2x128xf32>
    %48 = arith.addf %45, %47 : vector<2x128xf32>
    %49 = arith.index_cast %arg0 : i32 to index
    %c0_19 = arith.constant 0 : index
    %50 = memref.load %arg9[%49, %c0_19] : memref<2x3xf32, #tpu.memory_space<smem>>
    %51 = vector.broadcast %50 : f32 to vector<2x128xf32>
    %52 = arith.addf %48, %51 : vector<2x128xf32>
    %c0_20 = arith.constant 0 : index
    %c0_21 = arith.constant 0 : index
    %c0_22 = arith.constant 0 : index
    %c0_23 = arith.constant 0 : index
    %53 = vector.load %arg11[%c0_20, %c0_21, %c0_22, %c0_23] : memref<1x3x2x128xf32, #tpu.memory_space<vmem>>, vector<1x1x2x128xf32>
    %54 = vector.shape_cast %53 : vector<1x1x2x128xf32> to vector<2x128xf32>
    %55 = vector.shape_cast %52 : vector<2x128xf32> to vector<1x1x2x128xf32>
    tpu.vector_store %arg11[%c0_20, %c0_21, %c0_22, %c0_23], %55 {strides = array<i32>} : memref<1x3x2x128xf32, #tpu.memory_space<vmem>>, vector<1x1x2x128xf32>,
    %c1_24 = arith.constant 1 : index
    %c0_25 = arith.constant 0 : index
    %56 = memref.load %arg7[%c1_24, %c0_25] : memref<3x3xf32, #tpu.memory_space<smem>>
    %57 = vector.extract_strided_slice %27 {offsets = [0, 0, 0, 0], sizes = [1, 1, 2, 128], strides = [1, 1, 1, 1]} : vector<1x3x2x128xf32> to vector<1x1x2x128xf32>
    %58 = vector.shape_cast %57 : vector<1x1x2x128xf32> to vector<2x128xf32>
    %59 = vector.broadcast %56 : f32 to vector<2x128xf32>
    %60 = arith.mulf %59, %58 : vector<2x128xf32>
    %c1_26 = arith.constant 1 : index
    %c1_27 = arith.constant 1 : index
    %61 = memref.load %arg7[%c1_26, %c1_27] : memref<3x3xf32, #tpu.memory_space<smem>>
    %62 = vector.extract_strided_slice %27 {offsets = [0, 1, 0, 0], sizes = [1, 1, 2, 128], strides = [1, 1, 1, 1]} : vector<1x3x2x128xf32> to vector<1x1x2x128xf32>
    %63 = vector.shape_cast %62 : vector<1x1x2x128xf32> to vector<2x128xf32>
    %64 = vector.broadcast %61 : f32 to vector<2x128xf32>
    %65 = arith.mulf %64, %63 : vector<2x128xf32>
    %66 = arith.addf %60, %65 : vector<2x128xf32>
    %c1_28 = arith.constant 1 : index
    %c2_29 = arith.constant 2 : index
    %67 = memref.load %arg7[%c1_28, %c2_29] : memref<3x3xf32, #tpu.memory_space<smem>>
    %68 = vector.extract_strided_slice %27 {offsets = [0, 2, 0, 0], sizes = [1, 1, 2, 128], strides = [1, 1, 1, 1]} : vector<1x3x2x128xf32> to vector<1x1x2x128xf32>
    %69 = vector.shape_cast %68 : vector<1x1x2x128xf32> to vector<2x128xf32>
    %70 = vector.broadcast %67 : f32 to vector<2x128xf32>
    %71 = arith.mulf %70, %69 : vector<2x128xf32>
    %72 = arith.addf %66, %71 : vector<2x128xf32>
    %c1_30 = arith.constant 1 : index
    %73 = memref.load %arg8[%c1_30] : memref<3xf32, #tpu.memory_space<smem>>
    %74 = vector.broadcast %73 : f32 to vector<2x128xf32>
    %75 = arith.addf %72, %74 : vector<2x128xf32>
    %76 = arith.index_cast %arg0 : i32 to index
    %c1_31 = arith.constant 1 : index
    %77 = memref.load %arg9[%76, %c1_31] : memref<2x3xf32, #tpu.memory_space<smem>>
    %78 = vector.broadcast %77 : f32 to vector<2x128xf32>
    %79 = arith.addf %75, %78 : vector<2x128xf32>
    %c0_32 = arith.constant 0 : index
    %c1_33 = arith.constant 1 : index
    %c0_34 = arith.constant 0 : index
    %c0_35 = arith.constant 0 : index
    %80 = vector.load %arg11[%c0_32, %c1_33, %c0_34, %c0_35] : memref<1x3x2x128xf32, #tpu.memory_space<vmem>>, vector<1x1x2x128xf32>
    %81 = vector.shape_cast %80 : vector<1x1x2x128xf32> to vector<2x128xf32>
    %82 = vector.shape_cast %79 : vector<2x128xf32> to vector<1x1x2x128xf32>
    tpu.vector_store %arg11[%c0_32, %c1_33, %c0_34, %c0_35], %82 {strides = array<i32>} : memref<1x3x2x128xf32, #tpu.memory_space<vmem>>, vector<1x1x2x128xf32>,
    %c2_36 = arith.constant 2 : index
    %c0_37 = arith.constant 0 : index
    %83 = memref.load %arg7[%c2_36, %c0_37] : memref<3x3xf32, #tpu.memory_space<smem>>
    %84 = vector.extract_strided_slice %27 {offsets = [0, 0, 0, 0], sizes = [1, 1, 2, 128], strides = [1, 1, 1, 1]} : vector<1x3x2x128xf32> to vector<1x1x2x128xf32>
    %85 = vector.shape_cast %84 : vector<1x1x2x128xf32> to vector<2x128xf32>
    %86 = vector.broadcast %83 : f32 to vector<2x128xf32>
    %87 = arith.mulf %86, %85 : vector<2x128xf32>
    %c2_38 = arith.constant 2 : index
    %c1_39 = arith.constant 1 : index
    %88 = memref.load %arg7[%c2_38, %c1_39] : memref<3x3xf32, #tpu.memory_space<smem>>
    %89 = vector.extract_strided_slice %27 {offsets = [0, 1, 0, 0], sizes = [1, 1, 2, 128], strides = [1, 1, 1, 1]} : vector<1x3x2x128xf32> to vector<1x1x2x128xf32>
    %90 = vector.shape_cast %89 : vector<1x1x2x128xf32> to vector<2x128xf32>
    %91 = vector.broadcast %88 : f32 to vector<2x128xf32>
    %92 = arith.mulf %91, %90 : vector<2x128xf32>
    %93 = arith.addf %87, %92 : vector<2x128xf32>
    %c2_40 = arith.constant 2 : index
    %c2_41 = arith.constant 2 : index
    %94 = memref.load %arg7[%c2_40, %c2_41] : memref<3x3xf32, #tpu.memory_space<smem>>
    %95 = vector.extract_strided_slice %27 {offsets = [0, 2, 0, 0], sizes = [1, 1, 2, 128], strides = [1, 1, 1, 1]} : vector<1x3x2x128xf32> to vector<1x1x2x128xf32>
    %96 = vector.shape_cast %95 : vector<1x1x2x128xf32> to vector<2x128xf32>
    %97 = vector.broadcast %94 : f32 to vector<2x128xf32>
    %98 = arith.mulf %97, %96 : vector<2x128xf32>
    %99 = arith.addf %93, %98 : vector<2x128xf32>
    %c2_42 = arith.constant 2 : index
    %100 = memref.load %arg8[%c2_42] : memref<3xf32, #tpu.memory_space<smem>>
    %101 = vector.broadcast %100 : f32 to vector<2x128xf32>
    %102 = arith.addf %99, %101 : vector<2x128xf32>
    %103 = arith.index_cast %arg0 : i32 to index
    %c2_43 = arith.constant 2 : index
    %104 = memref.load %arg9[%103, %c2_43] : memref<2x3xf32, #tpu.memory_space<smem>>
    %105 = vector.broadcast %104 : f32 to vector<2x128xf32>
    %106 = arith.addf %102, %105 : vector<2x128xf32>
    %c0_44 = arith.constant 0 : index
    %c2_45 = arith.constant 2 : index
    %c0_46 = arith.constant 0 : index
    %c0_47 = arith.constant 0 : index
    %107 = vector.load %arg11[%c0_44, %c2_45, %c0_46, %c0_47] : memref<1x3x2x128xf32, #tpu.memory_space<vmem>>, vector<1x1x2x128xf32>
    %108 = vector.shape_cast %107 : vector<1x1x2x128xf32> to vector<2x128xf32>
    %109 = vector.shape_cast %106 : vector<2x128xf32> to vector<1x1x2x128xf32>
    tpu.vector_store %arg11[%c0_44, %c2_45, %c0_46, %c0_47], %109 {strides = array<i32>} : memref<1x3x2x128xf32, #tpu.memory_space<vmem>>, vector<1x1x2x128xf32>,
    return
  }
  func.func @transform_0(%arg0: i32, %arg1: i32) -> (i32, i32, i32, i32) {
    %c0_i32 = arith.constant 0 : i32
    %c0_i32_0 = arith.constant 0 : i32
    %c0_i32_1 = arith.constant 0 : i32
    return %arg0, %c0_i32, %arg1, %c0_i32_0 : i32, i32, i32, i32
  }
  func.func @transform_1(%arg0: i32, %arg1: i32) -> (i32, i32, i32, i32) {
    %c0_i32 = arith.constant 0 : i32
    %c0_i32_0 = arith.constant 0 : i32
    %c0_i32_1 = arith.constant 0 : i32
    return %arg0, %c0_i32, %arg1, %c0_i32_0 : i32, i32, i32, i32
  }
  func.func @transform_2(%arg0: i32, %arg1: i32) -> i32 {
    %c0_i32 = arith.constant 0 : i32
    %c0_i32_0 = arith.constant 0 : i32
    return %c0_i32 : i32
  }
  func.func @transform_3(%arg0: i32, %arg1: i32) -> i32 {
    %c0_i32 = arith.constant 0 : i32
    %c0_i32_0 = arith.constant 0 : i32
    return %c0_i32 : i32
  }
  func.func @transform_4(%arg0: i32, %arg1: i32) -> i32 {
    %c0_i32 = arith.constant 0 : i32
    %c0_i32_0 = arith.constant 0 : i32
    return %c0_i32 : i32
  }
  func.func @transform_5(%arg0: i32, %arg1: i32) -> (i32, i32) {
    %c0_i32 = arith.constant 0 : i32
    %c0_i32_0 = arith.constant 0 : i32
    %c0_i32_1 = arith.constant 0 : i32
    return %c0_i32, %c0_i32_0 : i32, i32
  }
  func.func @transform_6(%arg0: i32, %arg1: i32) -> i32 {
    %c0_i32 = arith.constant 0 : i32
    %c0_i32_0 = arith.constant 0 : i32
    return %c0_i32 : i32
  }
  func.func @transform_7(%arg0: i32, %arg1: i32) -> (i32, i32) {
    %c0_i32 = arith.constant 0 : i32
    %c0_i32_0 = arith.constant 0 : i32
    %c0_i32_1 = arith.constant 0 : i32
    return %c0_i32, %c0_i32_0 : i32, i32
  }
  func.func @transform_8(%arg0: i32, %arg1: i32) -> (i32, i32, i32, i32) {
    %c0_i32 = arith.constant 0 : i32
    %c0_i32_0 = arith.constant 0 : i32
    %c0_i32_1 = arith.constant 0 : i32
    return %arg0, %c0_i32, %arg1, %c0_i32_0 : i32, i32, i32, i32
  }
  func.func @transform_9(%arg0: i32, %arg1: i32) -> (i32, i32, i32, i32) {
    %c0_i32 = arith.constant 0 : i32
    %c0_i32_0 = arith.constant 0 : i32
    %c0_i32_1 = arith.constant 0 : i32
    return %arg0, %c0_i32, %arg1, %c0_i32_0 : i32, i32, i32, i32
  }
}

</mosaic_0001>

<llo_original>
// kernel: tpu_custom_call.1
$region0: #{tpu_custom_call.1}
  #allocation0 [shape = 'u32[]', space=smem, size = 0x4, offset = 0x4, fixed_abs, tag = 'smem constant byte address 0x4 - core index']
  #allocation1 [shape = 'u32[72,128]{1,0:T(1,128)}', space=vmem, size = 0x9000, scoped, tag = 'internal scratch']
  %s0 = inlined_call_operand.hbm [shape: f32[2,3,2,128], index: 0, kind: input, shape index: {}]
  %s1 = inlined_call_operand.hbm [shape: f32[2,3,2,128], index: 1, kind: input, shape index: {}]
  %s2 = inlined_call_operand.hbm [shape: f32[2], index: 2, kind: input, shape index: {}]
  %s3 = inlined_call_operand.hbm [shape: f32[2], index: 3, kind: input, shape index: {}]
  %s4 = inlined_call_operand.hbm [shape: f32[2], index: 4, kind: input, shape index: {}]
  %s5 = inlined_call_operand.vmem [shape: f32[3,3], index: 5, kind: input, shape index: {}]
  %s6 = inlined_call_operand.hbm [shape: f32[3], index: 6, kind: input, shape index: {}]
  %s7 = inlined_call_operand.vmem [shape: f32[2,3], index: 7, kind: input, shape index: {}]
  %s8 = inlined_call_operand.hbm [shape: f32[2,3,2,128], index: 8, kind: output, shape index: {0}]
  %s9 = inlined_call_operand.hbm [shape: f32[2,3,2,128], index: 9, kind: output, shape index: {1}]
  %10 = xla_tuple %s8, %s9
  %s11 = sld [smem:[#allocation0]]
  $region105: #{tpu_custom_call.1} parent=0
    _
  %s13 = ssub.s32 1, %s11
  %s14 = scalar_select 0, %s13, %s11
  $region1: #{tpu_custom_call.1} parent=0
    #allocation2 [shape = 'u8[6144]{0}', space=vmem, size = 0x1800, scoped, tag = 'input window, operand 0']
    #allocation3 [shape = 's32[2]{0}', space=sflag, size = 0x8, scoped, tag = 'scoped memory for tpu_custom_call.1']
    #allocation4 [shape = 's32[2]{0}', space=sflag, size = 0x8, scoped, tag = 'scoped memory for tpu_custom_call.1']
    #allocation5 [shape = 's32[2]{0}', space=sflag, size = 0x8, scoped, tag = 'scoped memory for tpu_custom_call.1']
    #allocation6 [shape = 's32[2]{0}', space=sflag, size = 0x8, scoped, tag = 'scoped memory for tpu_custom_call.1']
    #allocation7 [shape = 'u8[6144]{0}', space=vmem, size = 0x1800, scoped, tag = 'input window, operand 1']
    #allocation8 [shape = 's32[2]{0}', space=sflag, size = 0x8, scoped, tag = 'scoped memory for tpu_custom_call.1']
    #allocation9 [shape = 'u8[512]{0}', space=smem, size = 0x200, scoped, tag = 'input window, operand 2, single buffered']
    #allocation10 [shape = 'u8[512]{0}', space=smem, size = 0x200, scoped, tag = 'input window, operand 3, single buffered']
    #allocation11 [shape = 's32[1]{0}', space=sflag, size = 0x4, scoped, tag = 'scoped memory for tpu_custom_call.1']
    #allocation12 [shape = 'u8[512]{0}', space=smem, size = 0x200, scoped, tag = 'input window, operand 4, single buffered']
    #allocation13 [shape = 'u8[2048]{0}', space=smem, size = 0x800, scoped, tag = 'input window, operand 5, single buffered']
    #allocation14 [shape = 'u8[512]{0}', space=smem, size = 0x200, scoped, tag = 'input window, operand 6, single buffered']
    #allocation15 [shape = 's32[1]{0}', space=sflag, size = 0x4, scoped, tag = 'scoped memory for tpu_custom_call.1']
    #allocation16 [shape = 'u8[1024]{0}', space=smem, size = 0x400, scoped, tag = 'input window, operand 7, single buffered']
    #allocation17 [shape = 's32[1]{0}', space=sflag, size = 0x4, scoped, tag = 'scoped memory for tpu_custom_call.1']
    #allocation18 [shape = 'u8[6144]{0}', space=vmem, size = 0x1800, scoped, tag = 'output window, operand 0']
    #allocation19 [shape = 'u8[6144]{0}', space=vmem, size = 0x1800, scoped, tag = 'output window, operand 1']
    #allocation20 [shape = 's32[2]{0}', space=sflag, size = 0x8, scoped, tag = 'scoped memory for tpu_custom_call.1']
    %15 = vsyncpa [#allocation3], 0
    %s16 = scalar_lea.sflag [#allocation3], 1
    %17 = vsyncpa %s16, 0
    %18 = vsyncpa [#allocation8], 0
    %s19 = scalar_lea.sflag [#allocation8], 1
    %20 = vsyncpa %s19, 0
    %21 = vsyncpa [#allocation5], 0
    %22 = vsyncpa [#allocation11], 0
    %23 = vsyncpa [#allocation6], 0
    %24 = vsyncpa [#allocation15], 0
    %25 = vsyncpa [#allocation17], 0
    %26 = vsyncpa [#allocation4], 0
    %s27 = scalar_lea.sflag [#allocation4], 1
    %28 = vsyncpa %s27, 0
    %29 = vsyncpa [#allocation20], 0
    %s30 = scalar_lea.sflag [#allocation20], 1
    %31 = vsyncpa %s30, 0
    loop: start=0, step=1, limit=4
    $region2: #{tpu_custom_call.1} parent=1 // loop_pre_header
      _
    $region3: #{tpu_custom_call.1} parent=1 // loop_header
      %s33 = sphi 0, %s37
      %p34 = scmp.ge.s32.totalorder %s33, 4
      %s40 = sphi 0, %s52
      %s41 = sphi 0, %s48
      %s42 = sphi 0, %s40
      %s43 = sphi 0, %s41
      %s44 = sphi 0, %s42
      %s45 = sphi 0, %s43
      %s57 = sphi 0, %s59
      %s60 = sphi 0, %s57
      %s61 = sphi 0, %s60
      %s77 = sphi 0, %s61
      %s85 = sphi 0, %s87
      %s88 = sphi 0, %s85
      %s89 = sphi 0, %s88
      %s105 = sphi 0, %s89
      %s109 = sphi 0, %s109
      %s111 = sphi 0, %s109
      %s112 = sphi 0, %s111
      %s126 = sphi 0, %s112
      %s130 = sphi 0, %s130
      %s132 = sphi 0, %s130
      %s133 = sphi 0, %s132
      %s147 = sphi 0, %s133
      %s151 = sphi 0, %s151
      %s153 = sphi 0, %s151
      %s154 = sphi 0, %s153
      %s168 = sphi 0, %s154
      %s172 = sphi 0, %s172
      %s174 = sphi 0, %s172
      %s175 = sphi 0, %s174
      %s189 = sphi 0, %s175
      %s193 = sphi 0, %s193
      %s195 = sphi 0, %s193
      %s196 = sphi 0, %s195
      %s210 = sphi 0, %s196
      %s214 = sphi 0, %s214
      %s216 = sphi 0, %s214
      %s217 = sphi 0, %s216
      %s231 = sphi 0, %s217
      %s239 = sphi 0, %s241
      %s242 = sphi 0, %s239
      %s243 = sphi 0, %s242
      %s259 = sphi 0, %s243
      %s267 = sphi 0, %s269
      %s270 = sphi 0, %s267
      %s271 = sphi 0, %s270
      %s287 = sphi 0, %s271
    $region4: #{tpu_custom_call.1} parent=1 // loop_header_branch
      %36 = sbr.rel (%p34) target = $region8
    $region5: #{tpu_custom_call.1} parent=1 // loop_body
      %s38 = ssub.s32 %s33, 1
      %s39 = ssub.s32 %s33, 2
      %s46 = sadd.s32 1, %s41
      %p47 = scmp.ge.s32.totalorder %s46, 1
      %s48 = scalar_select %p47, 0, %s46
      %s49 = sadd.s32 1, %s40
      %s50 = scalar_select %p47, %s49, %s40
      %p51 = scmp.ge.s32.totalorder %s50, 2
      %s52 = scalar_select %p51, 0, %s50
      %s53 = ssub.s32 %s40, %s52
      %s54 = ssub.s32 %s41, %s48
      %s55 = sor.u32 %s53, %s54
      %p56 = scmp.eq.s32.totalorder %s55, 0
      %s58 = sadd.s32 %s57, 1
      %s59 = scalar_select %p56, %s57, %s58
      %p62 = pneg %p56
      %p63 = scmp.eq.s32.totalorder %s33, 1
      %p64 = por %p62, %p63
      %p65 = scmp.ne.s32.totalorder %s57, %s60
      %p66 = scmp.eq.s32.totalorder %s33, 0
      %p67 = por %p65, %p66
      %p68 = scmp.ne.s32.totalorder %s57, %s60
      %p69 = scmp.eq.s32.totalorder %s38, 1
      %p70 = por %p68, %p69
      %p71 = scmp.ne.s32.totalorder %s60, %s61
      %p72 = scmp.eq.s32.totalorder %s38, 0
      %p73 = por %p71, %p72
      %p74 = scmp.ne.s32.totalorder %s60, %s61
      %p75 = scmp.eq.s32.totalorder %s39, 1
      %p76 = por %p74, %p75
      %p78 = scmp.ne.s32.totalorder %s61, %s77
      %p79 = scmp.eq.s32.totalorder %s39, 0
      %p80 = por %p78, %p79
      %s81 = ssub.s32 %s40, %s52
      %s82 = ssub.s32 %s41, %s48
      %s83 = sor.u32 %s81, %s82
      %p84 = scmp.eq.s32.totalorder %s83, 0
      %s86 = sadd.s32 %s85, 1
      %s87 = scalar_select %p84, %s85, %s86
      %p90 = pneg %p84
      %p91 = scmp.eq.s32.totalorder %s33, 1
      %p92 = por %p90, %p91
      %p93 = scmp.ne.s32.totalorder %s85, %s88
      %p94 = scmp.eq.s32.totalorder %s33, 0
      %p95 = por %p93, %p94
      %p96 = scmp.ne.s32.totalorder %s85, %s88
      %p97 = scmp.eq.s32.totalorder %s38, 1
      %p98 = por %p96, %p97
      %p99 = scmp.ne.s32.totalorder %s88, %s89
      %p100 = scmp.eq.s32.totalorder %s38, 0
      %p101 = por %p99, %p100
      %p102 = scmp.ne.s32.totalorder %s88, %s89
      %p103 = scmp.eq.s32.totalorder %s39, 1
      %p104 = por %p102, %p103
      %p106 = scmp.ne.s32.totalorder %s89, %s105
      %p107 = scmp.eq.s32.totalorder %s39, 0
      %p108 = por %p106, %p107
      %s110 = sadd.s32 %s109, 1
      %p113 = scmp.eq.s32.totalorder %s33, 1
      %p114 = scmp.ne.s32.totalorder %s109, %s111
      %p115 = scmp.eq.s32.totalorder %s33, 0
      %p116 = por %p114, %p115
      %p117 = scmp.ne.s32.totalorder %s109, %s111
      %p118 = scmp.eq.s32.totalorder %s38, 1
      %p119 = por %p117, %p118
      %p120 = scmp.ne.s32.totalorder %s111, %s112
      %p121 = scmp.eq.s32.totalorder %s38, 0
      %p122 = por %p120, %p121
      %p123 = scmp.ne.s32.totalorder %s111, %s112
      %p124 = scmp.eq.s32.totalorder %s39, 1
      %p125 = por %p123, %p124
      %p127 = scmp.ne.s32.totalorder %s112, %s126
      %p128 = scmp.eq.s32.totalorder %s39, 0
      %p129 = por %p127, %p128
      %s131 = sadd.s32 %s130, 1
      %p134 = scmp.eq.s32.totalorder %s33, 1
      %p135 = scmp.ne.s32.totalorder %s130, %s132
      %p136 = scmp.eq.s32.totalorder %s33, 0
      %p137 = por %p135, %p136
      %p138 = scmp.ne.s32.totalorder %s130, %s132
      %p139 = scmp.eq.s32.totalorder %s38, 1
      %p140 = por %p138, %p139
      %p141 = scmp.ne.s32.totalorder %s132, %s133
      %p142 = scmp.eq.s32.totalorder %s38, 0
      %p143 = por %p141, %p142
      %p144 = scmp.ne.s32.totalorder %s132, %s133
      %p145 = scmp.eq.s32.totalorder %s39, 1
      %p146 = por %p144, %p145
      %p148 = scmp.ne.s32.totalorder %s133, %s147
      %p149 = scmp.eq.s32.totalorder %s39, 0
      %p150 = por %p148, %p149
      %s152 = sadd.s32 %s151, 1
      %p155 = scmp.eq.s32.totalorder %s33, 1
      %p156 = scmp.ne.s32.totalorder %s151, %s153
      %p157 = scmp.eq.s32.totalorder %s33, 0
      %p158 = por %p156, %p157
      %p159 = scmp.ne.s32.totalorder %s151, %s153
      %p160 = scmp.eq.s32.totalorder %s38, 1
      %p161 = por %p159, %p160
      %p162 = scmp.ne.s32.totalorder %s153, %s154
      %p163 = scmp.eq.s32.totalorder %s38, 0
      %p164 = por %p162, %p163
      %p165 = scmp.ne.s32.totalorder %s153, %s154
      %p166 = scmp.eq.s32.totalorder %s39, 1
      %p167 = por %p165, %p166
      %p169 = scmp.ne.s32.totalorder %s154, %s168
      %p170 = scmp.eq.s32.totalorder %s39, 0
      %p171 = por %p169, %p170
      %s173 = sadd.s32 %s172, 1
      %p176 = scmp.eq.s32.totalorder %s33, 1
      %p177 = scmp.ne.s32.totalorder %s172, %s174
      %p178 = scmp.eq.s32.totalorder %s33, 0
      %p179 = por %p177, %p178
      %p180 = scmp.ne.s32.totalorder %s172, %s174
      %p181 = scmp.eq.s32.totalorder %s38, 1
      %p182 = por %p180, %p181
      %p183 = scmp.ne.s32.totalorder %s174, %s175
      %p184 = scmp.eq.s32.totalorder %s38, 0
      %p185 = por %p183, %p184
      %p186 = scmp.ne.s32.totalorder %s174, %s175
      %p187 = scmp.eq.s32.totalorder %s39, 1
      %p188 = por %p186, %p187
      %p190 = scmp.ne.s32.totalorder %s175, %s189
      %p191 = scmp.eq.s32.totalorder %s39, 0
      %p192 = por %p190, %p191
      %s194 = sadd.s32 %s193, 1
      %p197 = scmp.eq.s32.totalorder %s33, 1
      %p198 = scmp.ne.s32.totalorder %s193, %s195
      %p199 = scmp.eq.s32.totalorder %s33, 0
      %p200 = por %p198, %p199
      %p201 = scmp.ne.s32.totalorder %s193, %s195
      %p202 = scmp.eq.s32.totalorder %s38, 1
      %p203 = por %p201, %p202
      %p204 = scmp.ne.s32.totalorder %s195, %s196
      %p205 = scmp.eq.s32.totalorder %s38, 0
      %p206 = por %p204, %p205
      %p207 = scmp.ne.s32.totalorder %s195, %s196
      %p208 = scmp.eq.s32.totalorder %s39, 1
      %p209 = por %p207, %p208
      %p211 = scmp.ne.s32.totalorder %s196, %s210
      %p212 = scmp.eq.s32.totalorder %s39, 0
      %p213 = por %p211, %p212
      %s215 = sadd.s32 %s214, 1
      %p218 = scmp.eq.s32.totalorder %s33, 1
      %p219 = scmp.ne.s32.totalorder %s214, %s216
      %p220 = scmp.eq.s32.totalorder %s33, 0
      %p221 = por %p219, %p220
      %p222 = scmp.ne.s32.totalorder %s214, %s216
      %p223 = scmp.eq.s32.totalorder %s38, 1
      %p224 = por %p222, %p223
      %p225 = scmp.ne.s32.totalorder %s216, %s217
      %p226 = scmp.eq.s32.totalorder %s38, 0
      %p227 = por %p225, %p226
      %p228 = scmp.ne.s32.totalorder %s216, %s217
      %p229 = scmp.eq.s32.totalorder %s39, 1
      %p230 = por %p228, %p229
      %p232 = scmp.ne.s32.totalorder %s217, %s231
      %p233 = scmp.eq.s32.totalorder %s39, 0
      %p234 = por %p232, %p233
      %s235 = ssub.s32 %s40, %s52
      %s236 = ssub.s32 %s41, %s48
      %s237 = sor.u32 %s235, %s236
      %p238 = scmp.eq.s32.totalorder %s237, 0
      %s240 = sadd.s32 %s239, 1
      %s241 = scalar_select %p238, %s239, %s240
      %p244 = pneg %p238
      %p245 = scmp.eq.s32.totalorder %s33, 1
      %p246 = por %p244, %p245
      %p247 = scmp.ne.s32.totalorder %s239, %s242
      %p248 = scmp.eq.s32.totalorder %s33, 0
      %p249 = por %p247, %p248
      %p250 = scmp.ne.s32.totalorder %s239, %s242
      %p251 = scmp.eq.s32.totalorder %s38, 1
      %p252 = por %p250, %p251
      %p253 = scmp.ne.s32.totalorder %s242, %s243
      %p254 = scmp.eq.s32.totalorder %s38, 0
      %p255 = por %p253, %p254
      %p256 = scmp.ne.s32.totalorder %s242, %s243
      %p257 = scmp.eq.s32.totalorder %s39, 1
      %p258 = por %p256, %p257
      %p260 = scmp.ne.s32.totalorder %s243, %s259
      %p261 = scmp.eq.s32.totalorder %s39, 0
      %p262 = por %p260, %p261
      %s263 = ssub.s32 %s40, %s52
      %s264 = ssub.s32 %s41, %s48
      %s265 = sor.u32 %s263, %s264
      %p266 = scmp.eq.s32.totalorder %s265, 0
      %s268 = sadd.s32 %s267, 1
      %s269 = scalar_select %p266, %s267, %s268
      %p272 = pneg %p266
      %p273 = scmp.eq.s32.totalorder %s33, 1
      %p274 = por %p272, %p273
      %p275 = scmp.ne.s32.totalorder %s267, %s270
      %p276 = scmp.eq.s32.totalorder %s33, 0
      %p277 = por %p275, %p276
      %p278 = scmp.ne.s32.totalorder %s267, %s270
      %p279 = scmp.eq.s32.totalorder %s38, 1
      %p280 = por %p278, %p279
      %p281 = scmp.ne.s32.totalorder %s270, %s271
      %p282 = scmp.eq.s32.totalorder %s38, 0
      %p283 = por %p281, %p282
      %p284 = scmp.ne.s32.totalorder %s270, %s271
      %p285 = scmp.eq.s32.totalorder %s39, 1
      %p286 = por %p284, %p285
      %p288 = scmp.ne.s32.totalorder %s271, %s287
      %p289 = scmp.eq.s32.totalorder %s39, 0
      %p290 = por %p288, %p289
      %p291 = scmp.le.s32.totalorder 1, %s33
      %p292 = scmp.lt.s32.totalorder %s33, 3
      %p293 = pnand %p291, %p292
      %p294 = pneg %p293
      // Predicated region
      $region9: #{tpu_custom_call.1} parent=5 // pred_check
        _
      $region10: #{tpu_custom_call.1} parent=5 // pred_check_branch
        %296 = sbr.rel (%p293) target = $region12
      $region11: #{tpu_custom_call.1} parent=5 // pred_region
        %s297 = ssub.s32 %s33, 1
        // Predicated region
        $region13: #{tpu_custom_call.1} parent=11 // pred_check
          %p298 = pneg %p122
        $region14: #{tpu_custom_call.1} parent=11 // pred_check_branch
          %300 = sbr.rel (%p298) target = $region16
        $region15: #{tpu_custom_call.1} parent=11 // pred_region
          %302 = vsyncadd [#allocation5], 0
          %s304 = sshll.u32 %s2, 4
          %s305 = int_to_ptr.hbm [resolvable:$true] %s304
          %307 = dma.hbm_to_smem %s305, 16, [#allocation9], [#allocation5]
        $region16: #{tpu_custom_call.1} parent=11 // pred_fallthru
          _
        // Predicated region
        $region17: #{tpu_custom_call.1} parent=11 // pred_check
          %p308 = pneg %p143
        $region18: #{tpu_custom_call.1} parent=11 // pred_check_branch
          %310 = sbr.rel (%p308) target = $region20
        $region19: #{tpu_custom_call.1} parent=11 // pred_region
          %312 = vsyncadd [#allocation11], 0
          %s314 = sshll.u32 %s3, 4
          %s315 = int_to_ptr.hbm [resolvable:$true] %s314
          %317 = dma.hbm_to_smem %s315, 16, [#allocation10], [#allocation11]
        $region20: #{tpu_custom_call.1} parent=11 // pred_fallthru
          _
        // Predicated region
        $region21: #{tpu_custom_call.1} parent=11 // pred_check
          %p318 = pneg %p164
        $region22: #{tpu_custom_call.1} parent=11 // pred_check_branch
          %320 = sbr.rel (%p318) target = $region24
        $region23: #{tpu_custom_call.1} parent=11 // pred_region
          %322 = vsyncadd [#allocation11], 0
          %s324 = sshll.u32 %s4, 4
          %s325 = int_to_ptr.hbm [resolvable:$true] %s324
          %327 = dma.hbm_to_smem %s325, 16, [#allocation12], [#allocation11]
        $region24: #{tpu_custom_call.1} parent=11 // pred_fallthru
          _
        // Predicated region
        $region25: #{tpu_custom_call.1} parent=11 // pred_check
          %p328 = pneg %p185
        $region26: #{tpu_custom_call.1} parent=11 // pred_check_branch
          %330 = sbr.rel (%p328) target = $region28
        $region27: #{tpu_custom_call.1} parent=11 // pred_region
          %332 = vsyncadd [#allocation6], 0
          %s334 = sshll.u32 %s5, 4
          %s335 = int_to_ptr.vmem [resolvable:$true] %s334
          %337 = dma.vmem_to_smem %s335, 64, [#allocation13], [#allocation6]
        $region28: #{tpu_custom_call.1} parent=11 // pred_fallthru
          _
        // Predicated region
        $region29: #{tpu_custom_call.1} parent=11 // pred_check
          %p338 = pneg %p206
        $region30: #{tpu_custom_call.1} parent=11 // pred_check_branch
          %340 = sbr.rel (%p338) target = $region32
        $region31: #{tpu_custom_call.1} parent=11 // pred_region
          %342 = vsyncadd [#allocation15], 0
          %s344 = sshll.u32 %s6, 4
          %s345 = int_to_ptr.hbm [resolvable:$true] %s344
          %347 = dma.hbm_to_smem %s345, 16, [#allocation14], [#allocation15]
        $region32: #{tpu_custom_call.1} parent=11 // pred_fallthru
          _
        // Predicated region
        $region33: #{tpu_custom_call.1} parent=11 // pred_check
          %p348 = pneg %p227
        $region34: #{tpu_custom_call.1} parent=11 // pred_check_branch
          %350 = sbr.rel (%p348) target = $region36
        $region35: #{tpu_custom_call.1} parent=11 // pred_region
          %352 = vsyncadd [#allocation17], 0
          %s354 = sshll.u32 %s7, 4
          %s355 = int_to_ptr.vmem [resolvable:$true] %s354
          %357 = dma.vmem_to_smem %s355, 32, [#allocation16], [#allocation17]
        $region36: #{tpu_custom_call.1} parent=11 // pred_fallthru
          _
      $region12: #{tpu_custom_call.1} parent=5 // pred_fallthru
        _
      %p358 = scmp.lt.s32.totalorder %s33, 2
      // Predicated region
      $region37: #{tpu_custom_call.1} parent=5 // pred_check
        %p359 = pneg %p358
      $region38: #{tpu_custom_call.1} parent=5 // pred_check_branch
        %361 = sbr.rel (%p359) target = $region40
      $region39: #{tpu_custom_call.1} parent=5 // pred_region
        // Predicated region
        $region41: #{tpu_custom_call.1} parent=39 // pred_check
          %p362 = pneg %p67
        $region42: #{tpu_custom_call.1} parent=39 // pred_check_branch
          %364 = sbr.rel (%p362) target = $region44
        $region43: #{tpu_custom_call.1} parent=39 // pred_region
          %s365 = sand.u32 %s57, 1
          %s366 = scalar_lea.sflag [#allocation3], %s365
          %s367 = sand.u32 %s57, 1
          %s368 = smul.addr %s367, 6
          %s369 = scalar_lea.vmem [#allocation2], %s368
          %371 = vsyncadd %s366, 0
          %s372 = smul.addr %s40, 3
          %s373 = sadd.s32 %s41, %s372
          %s374 = smul.addr %s373, 2
          %s375 = scalar_lea.hbm %s0, %s374
          %s376 = sshll.u32 %s375, 4
          %s377 = int_to_ptr.hbm [resolvable:$true] %s376
          %s378 = sshll.u32 %s369, 4
          %s379 = int_to_ptr.vmem [resolvable:$true] %s378
          %384 = dma.hbm_to_vmem [thread:$0]  %s377, 96, %s379, %s366, 32, 32, 2
        $region44: #{tpu_custom_call.1} parent=39 // pred_fallthru
          _
        // Predicated region
        $region45: #{tpu_custom_call.1} parent=39 // pred_check
          %p385 = pneg %p95
        $region46: #{tpu_custom_call.1} parent=39 // pred_check_branch
          %387 = sbr.rel (%p385) target = $region48
        $region47: #{tpu_custom_call.1} parent=39 // pred_region
          %s388 = sand.u32 %s85, 1
          %s389 = scalar_lea.sflag [#allocation8], %s388
          %s390 = sand.u32 %s85, 1
          %s391 = smul.addr %s390, 6
          %s392 = scalar_lea.vmem [#allocation7], %s391
          %394 = vsyncadd %s389, 0
          %s395 = smul.addr %s40, 3
          %s396 = sadd.s32 %s41, %s395
          %s397 = smul.addr %s396, 2
          %s398 = scalar_lea.hbm %s1, %s397
          %s399 = sshll.u32 %s398, 4
          %s400 = int_to_ptr.hbm [resolvable:$true] %s399
          %s401 = sshll.u32 %s392, 4
          %s402 = int_to_ptr.vmem [resolvable:$true] %s401
          %407 = dma.hbm_to_vmem [thread:$0]  %s400, 96, %s402, %s389, 32, 32, 2
        $region48: #{tpu_custom_call.1} parent=39 // pred_fallthru
          _
      $region40: #{tpu_custom_call.1} parent=5 // pred_fallthru
        _
      %p408 = scmp.le.s32.totalorder 1, %s33
      %p409 = scmp.lt.s32.totalorder %s33, 3
      %p410 = pnand %p408, %p409
      %p411 = pneg %p410
      // Predicated region
      $region49: #{tpu_custom_call.1} parent=5 // pred_check
        _
      $region50: #{tpu_custom_call.1} parent=5 // pred_check_branch
        %413 = sbr.rel (%p410) target = $region52
      $region51: #{tpu_custom_call.1} parent=5 // pred_region
        %s414 = ssub.s32 %s33, 1
        %s415 = sand.u32 %s60, 1
        %s416 = scalar_lea.sflag [#allocation3], %s415
        %s417 = sand.u32 %s60, 1
        %s418 = smul.addr %s417, 6
        %s419 = scalar_lea.vmem [#allocation2], %s418
        // Predicated region
        $region53: #{tpu_custom_call.1} parent=51 // pred_check
          %p420 = pneg %p73
        $region54: #{tpu_custom_call.1} parent=51 // pred_check_branch
          %422 = sbr.rel (%p420) target = $region56
        $region55: #{tpu_custom_call.1} parent=51 // pred_region
          %424 = dma.done %s416, 96
        $region56: #{tpu_custom_call.1} parent=51 // pred_fallthru
          _
        %s425 = sand.u32 %s88, 1
        %s426 = scalar_lea.sflag [#allocation8], %s425
        %s427 = sand.u32 %s88, 1
        %s428 = smul.addr %s427, 6
        %s429 = scalar_lea.vmem [#allocation7], %s428
        // Predicated region
        $region57: #{tpu_custom_call.1} parent=51 // pred_check
          %p430 = pneg %p101
        $region58: #{tpu_custom_call.1} parent=51 // pred_check_branch
          %432 = sbr.rel (%p430) target = $region60
        $region59: #{tpu_custom_call.1} parent=51 // pred_region
          %434 = dma.done %s426, 96
        $region60: #{tpu_custom_call.1} parent=51 // pred_fallthru
          _
        // Predicated region
        $region61: #{tpu_custom_call.1} parent=51 // pred_check
          %p435 = pneg %p122
        $region62: #{tpu_custom_call.1} parent=51 // pred_check_branch
          %437 = sbr.rel (%p435) target = $region64
        $region63: #{tpu_custom_call.1} parent=51 // pred_region
          %439 = dma.done [#allocation5], 16
        $region64: #{tpu_custom_call.1} parent=51 // pred_fallthru
          _
        // Predicated region
        $region65: #{tpu_custom_call.1} parent=51 // pred_check
          %p440 = pneg %p143
        $region66: #{tpu_custom_call.1} parent=51 // pred_check_branch
          %442 = sbr.rel (%p440) target = $region68
        $region67: #{tpu_custom_call.1} parent=51 // pred_region
          %444 = dma.done [#allocation11], 16
        $region68: #{tpu_custom_call.1} parent=51 // pred_fallthru
          _
        // Predicated region
        $region69: #{tpu_custom_call.1} parent=51 // pred_check
          %p445 = pneg %p164
        $region70: #{tpu_custom_call.1} parent=51 // pred_check_branch
          %447 = sbr.rel (%p445) target = $region72
        $region71: #{tpu_custom_call.1} parent=51 // pred_region
          %449 = dma.done [#allocation11], 16
        $region72: #{tpu_custom_call.1} parent=51 // pred_fallthru
          _
        // Predicated region
        $region73: #{tpu_custom_call.1} parent=51 // pred_check
          %p450 = pneg %p185
        $region74: #{tpu_custom_call.1} parent=51 // pred_check_branch
          %452 = sbr.rel (%p450) target = $region76
        $region75: #{tpu_custom_call.1} parent=51 // pred_region
          %454 = dma.done [#allocation6], 64
        $region76: #{tpu_custom_call.1} parent=51 // pred_fallthru
          _
        // Predicated region
        $region77: #{tpu_custom_call.1} parent=51 // pred_check
          %p455 = pneg %p206
        $region78: #{tpu_custom_call.1} parent=51 // pred_check_branch
          %457 = sbr.rel (%p455) target = $region80
        $region79: #{tpu_custom_call.1} parent=51 // pred_region
          %459 = dma.done [#allocation15], 16
        $region80: #{tpu_custom_call.1} parent=51 // pred_fallthru
          _
        // Predicated region
        $region81: #{tpu_custom_call.1} parent=51 // pred_check
          %p460 = pneg %p227
        $region82: #{tpu_custom_call.1} parent=51 // pred_check_branch
          %462 = sbr.rel (%p460) target = $region84
        $region83: #{tpu_custom_call.1} parent=51 // pred_region
          %464 = dma.done [#allocation17], 32
        $region84: #{tpu_custom_call.1} parent=51 // pred_fallthru
          _
        %465 = sfence
        %s466 = sand.u32 %s60, 1
        %s467 = scalar_lea.sflag [#allocation3], %s466
        %s468 = sand.u32 %s60, 1
        %s469 = smul.addr %s468, 6
        %s470 = scalar_lea.vmem [#allocation2], %s469
        %p471 = pneg %p73
        %p472 = pneg %p70
        %s473 = sand.u32 %s88, 1
        %s474 = scalar_lea.sflag [#allocation8], %s473
        %s475 = sand.u32 %s88, 1
        %s476 = smul.addr %s475, 6
        %s477 = scalar_lea.vmem [#allocation7], %s476
        %p478 = pneg %p101
        %p479 = pneg %p98
        %p480 = pneg %p122
        %p481 = pneg %p119
        %p482 = pneg %p143
        %p483 = pneg %p140
        %p484 = pneg %p164
        %p485 = pneg %p161
        %p486 = pneg %p185
        %p487 = pneg %p182
        %p488 = pneg %p206
        %p489 = pneg %p203
        %p490 = pneg %p227
        %p491 = pneg %p224
        %p492 = pneg %p255
        %p493 = pneg %p252
        %s494 = sand.u32 %s242, 1
        %s495 = scalar_lea.sflag [#allocation4], %s494
        %s496 = sand.u32 %s242, 1
        %s497 = smul.addr %s496, 6
        %s498 = scalar_lea.vmem [#allocation18], %s497
        %p499 = pneg %p283
        %p500 = pneg %p280
        %s501 = sand.u32 %s270, 1
        %s502 = scalar_lea.sflag [#allocation20], %s501
        %s503 = sand.u32 %s270, 1
        %s504 = smul.addr %s503, 6
        %s505 = scalar_lea.vmem [#allocation19], %s504
        %s506 = sld [smem:[#allocation9 + %s42]]
        %s507 = sld [smem:[#allocation10 + %s42]]
        %s508 = sld [smem:[#allocation12 + %s42]]
        %v509 = vld [vmem:[%s419] sm:$0x3]
        %v510 = vld [vmem:[%s419 + $0x2] sm:$0x3]
        %v511 = vld [vmem:[%s419 + $0x4] sm:$0x3]
        %v512 = vld [vmem:[%s429] sm:$0x3]
        %v513 = vld [vmem:[%s429 + $0x2] sm:$0x3]
        %v514 = vld [vmem:[%s429 + $0x4] sm:$0x3]
        %v515 = vstv %s506
        %v516 = vmul.f32 %v515, %v509
        %v517 = vmul.f32 %v515, %v510
        %v518 = vmul.f32 %v515, %v511
        %v519 = vadd.f32 %v516, 10.0
        %v520 = vadd.f32 %v517, 10.0
        %v521 = vadd.f32 %v518, 10.0
        %v522 = vrsqrt.pop %v519
        %v523 = vmul.f32 %v522, %v519
        %v524 = vmul.f32 %v523, %v522
        %v525 = vmul.f32 0.5, %v524
        %v526 = vsub.f32 1.5, %v525
        %v527 = vmul.f32 %v522, %v526
        %v528 = vmul.f32 %v519, %v527
        %vm529 = vcmp.eq.f32.partialorder %v519, inf
        %v530 = vsel %vm529, %v519, %v528
        %vm531 = vcmp.eq.f32.partialorder %v519, 0.0
        %v532 = vand.u32 %v519, 2147483648
        %v533 = vsel %vm531, %v532, %v530
        %v534 = vrsqrt.pop %v520
        %v535 = vmul.f32 %v534, %v520
        %v536 = vmul.f32 %v535, %v534
        %v537 = vmul.f32 0.5, %v536
        %v538 = vsub.f32 1.5, %v537
        %v539 = vmul.f32 %v534, %v538
        %v540 = vmul.f32 %v520, %v539
        %vm541 = vcmp.eq.f32.partialorder %v520, inf
        %v542 = vsel %vm541, %v520, %v540
        %vm543 = vcmp.eq.f32.partialorder %v520, 0.0
        %v544 = vand.u32 %v520, 2147483648
        %v545 = vsel %vm543, %v544, %v542
        %v546 = vrsqrt.pop %v521
        %v547 = vmul.f32 %v546, %v521
        %v548 = vmul.f32 %v547, %v546
        %v549 = vmul.f32 0.5, %v548
        %v550 = vsub.f32 1.5, %v549
        %v551 = vmul.f32 %v546, %v550
        %v552 = vmul.f32 %v521, %v551
        %vm553 = vcmp.eq.f32.partialorder %v521, inf
        %v554 = vsel %vm553, %v521, %v552
        %vm555 = vcmp.eq.f32.partialorder %v521, 0.0
        %v556 = vand.u32 %v521, 2147483648
        %v557 = vsel %vm555, %v556, %v554
        %v558 = vmul.f32 %v533, %v512
        %v559 = vmul.f32 %v545, %v513
        %v560 = vmul.f32 %v557, %v514
        %v561 = vadd.f32 %v519, %v558
        %v562 = vadd.f32 %v520, %v559
        %v563 = vadd.f32 %v521, %v560
        %v564 = vadd.f32 %v561, 0.5
        %v565 = vadd.f32 %v562, 0.5
        %v566 = vadd.f32 %v563, 0.5
        %v567 = vfloor.f32 %v564
        %v568 = vfloor.f32 %v565
        %v569 = vfloor.f32 %v566
        %v570 = vmax.f32 %v567, 0.0
        %v571 = vmax.f32 %v568, 0.0
        %v572 = vmax.f32 %v569, 0.0
        %v573 = vstv %s507
        %v574 = vmul.f32 %v570, %v573
        %v575 = vmul.f32 %v571, %v573
        %v576 = vmul.f32 %v572, %v573
        %v577 = vstv %s508
        %v578 = vmul.f32 %v577, %v574
        %v579 = vmul.f32 %v577, %v575
        %v580 = vmul.f32 %v577, %v576
        %s581 = ssub.f32 1.0, %s508
        %v582 = vstv %s581
        %v583 = vmul.f32 %v582, %v509
        %v584 = vmul.f32 %v582, %v510
        %v585 = vmul.f32 %v582, %v511
        %v586 = vadd.f32 %v578, %v583
        %v587 = vadd.f32 %v579, %v584
        %v588 = vadd.f32 %v580, %v585
        %589 = vst [vmem:[%s498] sm:$0x3] %v586
        %590 = vst [vmem:[%s498 + $0x2] sm:$0x3] %v587
        %591 = vst [vmem:[%s498 + $0x4] sm:$0x3] %v588
        %s592 = sld [smem:[#allocation13]]
        %v593 = vstv %s592
        %v594 = vmul.f32 %v593, %v586
        %s595 = sld [smem:[#allocation13 + $0x1]]
        %v596 = vstv %s595
        %v597 = vmul.f32 %v596, %v587
        %v598 = vadd.f32 %v594, %v597
        %s599 = sld [smem:[#allocation13 + $0x2]]
        %v600 = vstv %s599
        %v601 = vmul.f32 %v600, %v588
        %v602 = vadd.f32 %v598, %v601
        %s603 = sld [smem:[#allocation14]]
        %v604 = vstv %s603
        %v605 = vadd.f32 %v602, %v604
        %s606 = smul.u32 %s42, 128
        %s607 = sld [smem:[#allocation16 + %s606]]
        %v608 = vstv %s607
        %v609 = vadd.f32 %v605, %v608
        %610 = vst [vmem:[%s505] sm:$0x3] %v609
        %s611 = sld [smem:[#allocation13 + $0x80]]
        %v612 = vstv %s611
        %v613 = vmul.f32 %v612, %v586
        %s614 = sld [smem:[#allocation13 + $0x81]]
        %v615 = vstv %s614
        %v616 = vmul.f32 %v615, %v587
        %v617 = vadd.f32 %v613, %v616
        %s618 = sld [smem:[#allocation13 + $0x82]]
        %v619 = vstv %s618
        %v620 = vmul.f32 %v619, %v588
        %v621 = vadd.f32 %v617, %v620
        %s622 = sld [smem:[#allocation14 + $0x1]]
        %v623 = vstv %s622
        %v624 = vadd.f32 %v621, %v623
        %s625 = sadd.s32 %s606, 1
        %s626 = sld [smem:[#allocation16 + %s625]]
        %v627 = vstv %s626
        %v628 = vadd.f32 %v624, %v627
        %s629 = scalar_lea.vmem %s505, 2 [#allocation19]
        %630 = vst [vmem:[%s629] sm:$0x3] %v628
        %s631 = sld [smem:[#allocation13 + $0x100]]
        %v632 = vstv %s631
        %v633 = vmul.f32 %v632, %v586
        %s634 = sld [smem:[#allocation13 + $0x101]]
        %v635 = vstv %s634
        %v636 = vmul.f32 %v635, %v587
        %v637 = vadd.f32 %v633, %v636
        %s638 = sld [smem:[#allocation13 + $0x102]]
        %v639 = vstv %s638
        %v640 = vmul.f32 %v639, %v588
        %v641 = vadd.f32 %v637, %v640
        %s642 = sld [smem:[#allocation14 + $0x2]]
        %v643 = vstv %s642
        %v644 = vadd.f32 %v641, %v643
        %s645 = sadd.s32 %s606, 2
        %s646 = sld [smem:[#allocation16 + %s645]]
        %v647 = vstv %s646
        %v648 = vadd.f32 %v644, %v647
        %s649 = scalar_lea.vmem %s505, 4 [#allocation19]
        %650 = vst [vmem:[%s649] sm:$0x3] %v648
        %s651 = sand.u32 %s242, 1
        %s652 = scalar_lea.sflag [#allocation4], %s651
        %s653 = sand.u32 %s242, 1
        %s654 = smul.addr %s653, 6
        %s655 = scalar_lea.vmem [#allocation18], %s654
        %s656 = sand.u32 %s270, 1
        %s657 = scalar_lea.sflag [#allocation20], %s656
        %s658 = sand.u32 %s270, 1
        %s659 = smul.addr %s658, 6
        %s660 = scalar_lea.vmem [#allocation19], %s659
        // Predicated region
        $region85: #{tpu_custom_call.1} parent=51 // pred_check
          %p661 = pneg %p252
        $region86: #{tpu_custom_call.1} parent=51 // pred_check_branch
          %663 = sbr.rel (%p661) target = $region88
        $region87: #{tpu_custom_call.1} parent=51 // pred_region
          %665 = vsyncadd %s652, 0
          %s666 = smul.addr %s42, 3
          %s667 = sadd.s32 %s43, %s666
          %s668 = smul.addr %s667, 2
          %s669 = scalar_lea.hbm %s8, %s668
          %s670 = sshll.u32 %s655, 4
          %s671 = int_to_ptr.vmem [resolvable:$true] %s670
          %s672 = sshll.u32 %s669, 4
          %s673 = int_to_ptr.hbm [resolvable:$true] %s672
          %678 = dma.vmem_to_hbm [thread:$0]  %s671, 96, %s673, %s652, 32, 32, 2
        $region88: #{tpu_custom_call.1} parent=51 // pred_fallthru
          _
        // Predicated region
        $region89: #{tpu_custom_call.1} parent=51 // pred_check
          %p679 = pneg %p280
        $region90: #{tpu_custom_call.1} parent=51 // pred_check_branch
          %681 = sbr.rel (%p679) target = $region92
        $region91: #{tpu_custom_call.1} parent=51 // pred_region
          %683 = vsyncadd %s657, 0
          %s684 = smul.addr %s42, 3
          %s685 = sadd.s32 %s43, %s684
          %s686 = smul.addr %s685, 2
          %s687 = scalar_lea.hbm %s9, %s686
          %s688 = sshll.u32 %s660, 4
          %s689 = int_to_ptr.vmem [resolvable:$true] %s688
          %s690 = sshll.u32 %s687, 4
          %s691 = int_to_ptr.hbm [resolvable:$true] %s690
          %696 = dma.vmem_to_hbm [thread:$0]  %s689, 96, %s691, %s657, 32, 32, 2
        $region92: #{tpu_custom_call.1} parent=51 // pred_fallthru
          _
      $region52: #{tpu_custom_call.1} parent=5 // pred_fallthru
        _
      %p697 = scmp.le.s32.totalorder 2, %s33
      // Predicated region
      $region93: #{tpu_custom_call.1} parent=5 // pred_check
        %p698 = pneg %p697
      $region94: #{tpu_custom_call.1} parent=5 // pred_check_branch
        %700 = sbr.rel (%p698) target = $region96
      $region95: #{tpu_custom_call.1} parent=5 // pred_region
        %s701 = ssub.s32 %s33, 2
        // Predicated region
        $region97: #{tpu_custom_call.1} parent=95 // pred_check
          %p702 = pneg %p258
        $region98: #{tpu_custom_call.1} parent=95 // pred_check_branch
          %704 = sbr.rel (%p702) target = $region100
        $region99: #{tpu_custom_call.1} parent=95 // pred_region
          %s705 = sand.u32 %s243, 1
          %s706 = scalar_lea.sflag [#allocation4], %s705
          %s707 = sand.u32 %s243, 1
          %s708 = smul.addr %s707, 6
          %s709 = scalar_lea.vmem [#allocation18], %s708
          %711 = dma.done %s706, 96
        $region100: #{tpu_custom_call.1} parent=95 // pred_fallthru
          _
        // Predicated region
        $region101: #{tpu_custom_call.1} parent=95 // pred_check
          %p712 = pneg %p286
        $region102: #{tpu_custom_call.1} parent=95 // pred_check_branch
          %714 = sbr.rel (%p712) target = $region104
        $region103: #{tpu_custom_call.1} parent=95 // pred_region
          %s715 = sand.u32 %s271, 1
          %s716 = scalar_lea.sflag [#allocation20], %s715
          %s717 = sand.u32 %s271, 1
          %s718 = smul.addr %s717, 6
          %s719 = scalar_lea.vmem [#allocation19], %s718
          %721 = dma.done %s716, 96
        $region104: #{tpu_custom_call.1} parent=95 // pred_fallthru
          _
      $region96: #{tpu_custom_call.1} parent=5 // pred_fallthru
        _
    $region6: #{tpu_custom_call.1} parent=1 // loop_footer
      %s37 = sadd.s32 1, %s33
    $region7: #{tpu_custom_call.1} parent=1 // loop_footer_branch
      %32 = sbr.rel target = $region3
    $region8: #{tpu_custom_call.1} parent=1 // loop_exit
      _
    %722 = vsyncpa [#allocation3], 1
    %s723 = scalar_lea.sflag [#allocation3], 1
    %724 = vsyncpa %s723, 1
    %725 = vsyncpa [#allocation8], 1
    %s726 = scalar_lea.sflag [#allocation8], 1
    %727 = vsyncpa %s726, 1
    %728 = vsyncpa [#allocation4], 1
    %s729 = scalar_lea.sflag [#allocation4], 1
    %730 = vsyncpa %s729, 1
    %731 = vsyncpa [#allocation20], 1
    %s732 = scalar_lea.sflag [#allocation20], 1
    %733 = vsyncpa %s732, 1
    %734 = vsyncpa [#allocation5], 1
    %s735 = scalar_lea.sflag [#allocation5], 1
    %736 = vsyncpa %s735, 1
    %737 = vsyncpa [#allocation11], 1
    %738 = vsyncpa [#allocation15], 1
    %739 = vsyncpa [#allocation6], 1
    %s740 = scalar_lea.sflag [#allocation6], 1
    %741 = vsyncpa %s740, 1
    %742 = vsyncpa [#allocation17], 1

</llo_original>
